<compile_context>
chip_gen: v7x
topology: tpu7x:2x2x1
jax: 0.10.0
libtpu: 0.0.40
codegen_flags: <defaults>
</compile_context>

<pallas_src>
import jax
import jax.numpy as jnp
from jax import lax
from jax.experimental import pallas as pl
from jax.experimental.pallas import tpu as pltpu


def _mish_kernel(x_ref, o_ref):
    xf = x_ref[...].astype(jnp.float32)
    # mish(x) = x * tanh(softplus(x)).  With t = e^x:
    #   tanh(log1p(t)) = t*(t+2) / (t*(t+2) + 2)
    # Clamp the exp argument at 20 (torch softplus threshold); for x > 20,
    # tanh(softplus(x)) == 1 in f32, so mish(x) == x exactly.
    t = jnp.exp(jnp.minimum(xf, 20.0))
    num = t * (t + 2.0)
    den = num + 2.0                       # den in [2, ~2.4e17]: positive normal f32
    # VALU-only reciprocal of den (no EUP op):
    #   magic-constant bitcast seed (rel. err <= ~10%) + 3 Newton steps
    #   -> ~1-2 ulp accuracy, identical on hardware and in interpret mode.
    seed = lax.bitcast_convert_type(
        0x7EF311C3 - lax.bitcast_convert_type(den, jnp.int32), jnp.float32)
    r = seed * (2.0 - den * seed)
    r = r * (2.0 - den * r)
    r = r * (2.0 - den * r)
    y = jnp.where(xf > 20.0, xf, xf * num * r)
    o_ref[...] = y.astype(o_ref.dtype)


def mish(x, *, target_block_bytes=2 * 1024 * 1024):
    """Elementwise Mish via a Pallas TPU kernel (any input shape)."""
    orig_shape = x.shape
    orig_dtype = x.dtype
    n = x.size
    if n == 0:
        return x

    # Widest lane-dense width (multiple of 128, <= 1024) dividing n exactly, so
    # the ravel/reshape is a pure relabeling (no pad copy).
    lanes = 0
    for cand in (1024, 896, 768, 640, 512, 384, 256, 128):
        if n % cand == 0:
            lanes = cand
            break

    x_flat = jnp.ravel(x)
    pad = 0
    if lanes == 0:
        # Ragged fallback: tiny tail pad (mish(0) == 0), sliced off below.
        # TODO(synk): for very large ragged tensors an in-kernel tail mask would
        # avoid the extra pad/slice HBM passes.
        lanes = 128
        pad = (-n) % lanes
        x_flat = jnp.pad(x_flat, (0, pad))
    rows = (n + pad) // lanes
    x2d = x_flat.reshape(rows, lanes)

    # Dtype-aware block sizing: real itemsize, rows rounded to the packing
    # multiple (8 for 4B, 16 for 2B, 32 for 1B dtypes).
    itemsize = jnp.dtype(orig_dtype).itemsize
    sublane = max(8, 32 // itemsize)
    bytes_per_row = lanes * itemsize
    tile_rows = max(sublane,
                    (target_block_bytes // bytes_per_row) // sublane * sublane)

    if tile_rows >= rows:
        tile_rows = rows                      # full-extent block (always legal)
        if rows > sublane:
            # v7x megacore: keep >= 2 programs so the parallel axis shards
            # across both TensorCores instead of leaving one idle.
            half = -(-rows // 2)                        # cdiv(rows, 2)
            tile_rows = min(rows, -(-half // sublane) * sublane)
    grid = (pl.cdiv(rows, tile_rows),)        # ragged last block handled by Pallas

    cost = pl.CostEstimate(
        flops=16 * n,                 # VALU work (Newton steps, muls, selects)
        transcendentals=n,            # one exp per element
        bytes_accessed=2 * n * itemsize,
    )

    out2d = pl.pallas_call(
        _mish_kernel,
        out_shape=jax.ShapeDtypeStruct((rows, lanes), orig_dtype),
        grid_spec=pltpu.PrefetchScalarGridSpec(
            num_scalar_prefetch=0,
            grid=grid,
            in_specs=[pl.BlockSpec((tile_rows, lanes), lambda i: (i, 0))],
            out_specs=pl.BlockSpec((tile_rows, lanes), lambda i: (i, 0)),
        ),
        compiler_params=pltpu.CompilerParams(
            dimension_semantics=("parallel",),
            # ~2 MiB block * 4 live pipeline buffers + full-block f32
            # intermediates stays well under 40 MiB; safe on v5e/v6e (128 MiB)
            # and v7x (64 MiB per TC).
            vmem_limit_bytes=40 * 1024 * 1024,
        ),
        cost_estimate=cost,
    )(x2d)

    out_flat = out2d.reshape(-1)
    if pad:
        out_flat = out_flat[:n]
    return out_flat.reshape(orig_shape)


def _mish_ref(x):
    # pure-JAX reference matching torch: x * tanh(softplus(x)), threshold=20
    xf = x.astype(jnp.float32)
    sp = jnp.where(xf > 20.0, xf, jnp.log1p(jnp.exp(jnp.minimum(xf, 20.0))))
    return (xf * jnp.tanh(sp)).astype(x.dtype)


if __name__ == "__main__":
    key = jax.random.PRNGKey(0)
    # NCHW input, small shapes consistent with a conv-style activation
    x = jax.random.normal(key, (2, 4, 16, 16), dtype=jnp.float32)
    y = jax.block_until_ready(mish(x))
    y_ref = _mish_ref(x)
    assert y.shape == x.shape and y.dtype == x.dtype
    assert jnp.allclose(y, y_ref, atol=1e-5, rtol=1e-5)

    # Awkward size (not divisible by 128) + large magnitudes: exercises the
    # ragged/padded path, the x > 20 linear branch, and large-|y| rtol.
    x2 = 10.0 * jax.random.normal(jax.random.PRNGKey(1), (3, 5, 7, 11),
                                  dtype=jnp.float32)
    y2 = jax.block_until_ready(mish(x2))
    assert jnp.allclose(y2, _mish_ref(x2), atol=1e-5, rtol=1e-5)

    # bf16 path: dtype-aware block sizing + downcast-on-store accuracy.
    xb = jax.random.normal(jax.random.PRNGKey(2), (2, 4, 16, 16),
                           dtype=jnp.bfloat16)
    yb = jax.block_until_ready(mish(xb))
    assert yb.dtype == jnp.bfloat16 and yb.shape == xb.shape
    assert jnp.allclose(yb.astype(jnp.float32),
                        _mish_ref(xb).astype(jnp.float32),
                        atol=2e-2, rtol=2e-2)

    print("KERNEL_OK")
</pallas_src>

<mosaic_0001>
module attributes {stable_mosaic.version = 11 : i64} {
  func.func @_mish_kernel(%arg0: i32, %arg1: memref<2x1024xf32, #tpu.memory_space<vmem>>, %arg2: memref<2x1024xf32, #tpu.memory_space<vmem>>) attributes {dimension_semantics = [#tpu.dimension_semantics<parallel>], iteration_bounds = array<i64: 1>, scalar_prefetch = 0 : i64, scratch_operands = 0 : i64, tpu.core_type = #tpu.core_type<tc>, window_params = [{transform_indices = @transform_0, window_bounds = array<i64: 2, 1024>}, {transform_indices = @transform_1, window_bounds = array<i64: 2, 1024>}]} {
    %c0 = arith.constant 0 : index
    %c0_0 = arith.constant 0 : index
    %0 = vector.load %arg1[%c0, %c0_0] : memref<2x1024xf32, #tpu.memory_space<vmem>>, vector<2x1024xf32>
    %cst = arith.constant 2.000000e+01 : f32
    %1 = vector.broadcast %cst : f32 to vector<2x1024xf32>
    %2 = arith.minimumf %0, %1 : vector<2x1024xf32>
    %3 = math.exp %2 : vector<2x1024xf32>
    %cst_1 = arith.constant 2.000000e+00 : f32
    %4 = vector.broadcast %cst_1 : f32 to vector<2x1024xf32>
    %5 = arith.addf %3, %4 : vector<2x1024xf32>
    %6 = arith.mulf %3, %5 : vector<2x1024xf32>
    %cst_2 = arith.constant 2.000000e+00 : f32
    %7 = vector.broadcast %cst_2 : f32 to vector<2x1024xf32>
    %8 = arith.addf %6, %7 : vector<2x1024xf32>
    %9 = tpu.bitcast %8 : vector<2x1024xf32> -> vector<2x1024xi32>
    %c2129859011_i32 = arith.constant 2129859011 : i32
    %10 = vector.broadcast %c2129859011_i32 : i32 to vector<2x1024xi32>
    %11 = arith.subi %10, %9 : vector<2x1024xi32>
    %12 = tpu.bitcast %11 : vector<2x1024xi32> -> vector<2x1024xf32>
    %13 = arith.mulf %8, %12 : vector<2x1024xf32>
    %cst_3 = arith.constant 2.000000e+00 : f32
    %14 = vector.broadcast %cst_3 : f32 to vector<2x1024xf32>
    %15 = arith.subf %14, %13 : vector<2x1024xf32>
    %16 = arith.mulf %12, %15 : vector<2x1024xf32>
    %17 = arith.mulf %8, %16 : vector<2x1024xf32>
    %cst_4 = arith.constant 2.000000e+00 : f32
    %18 = vector.broadcast %cst_4 : f32 to vector<2x1024xf32>
    %19 = arith.subf %18, %17 : vector<2x1024xf32>
    %20 = arith.mulf %16, %19 : vector<2x1024xf32>
    %21 = arith.mulf %8, %20 : vector<2x1024xf32>
    %cst_5 = arith.constant 2.000000e+00 : f32
    %22 = vector.broadcast %cst_5 : f32 to vector<2x1024xf32>
    %23 = arith.subf %22, %21 : vector<2x1024xf32>
    %24 = arith.mulf %20, %23 : vector<2x1024xf32>
    %cst_6 = arith.constant 2.000000e+01 : f32
    %25 = vector.broadcast %cst_6 : f32 to vector<2x1024xf32>
    %26 = arith.cmpf ogt, %0, %25 : vector<2x1024xf32>
    %27 = arith.mulf %0, %6 : vector<2x1024xf32>
    %28 = arith.mulf %27, %24 : vector<2x1024xf32>
    %29 = arith.select %26, %0, %28 : vector<2x1024xi1>, vector<2x1024xf32>
    %c0_7 = arith.constant 0 : index
    %c0_8 = arith.constant 0 : index
    %30 = vector.load %arg2[%c0_7, %c0_8] : memref<2x1024xf32, #tpu.memory_space<vmem>>, vector<2x1024xf32>
    tpu.vector_store %arg2[%c0_7, %c0_8], %29 {strides = array<i32>} : memref<2x1024xf32, #tpu.memory_space<vmem>>, vector<2x1024xf32>,
    return
  }
  func.func @transform_0(%arg0: i32) -> (i32, i32) {
    %c0_i32 = arith.constant 0 : i32
    %c0_i32_0 = arith.constant 0 : i32
    return %arg0, %c0_i32 : i32, i32
  }
  func.func @transform_1(%arg0: i32) -> (i32, i32) {
    %c0_i32 = arith.constant 0 : i32
    %c0_i32_0 = arith.constant 0 : i32
    return %arg0, %c0_i32 : i32, i32
  }
}

</mosaic_0001>

<llo_original>
// kernel: tpu_custom_call.1
$region0: #{tpu_custom_call.1}
  #allocation0 [shape = 'u32[]', space=smem, size = 0x4, offset = 0x4, fixed_abs, tag = 'smem constant byte address 0x4 - core index']
  #allocation1 [shape = 'u32[144,128]{1,0:T(1,128)}', space=vmem, size = 0x12000, scoped, tag = 'internal scratch']
  %s0 = inlined_call_operand.hbm [shape: f32[2,1024], index: 0, kind: input, shape index: {}]
  %s1 = inlined_call_operand.hbm [shape: f32[2,1024], index: 1, kind: output, shape index: {}]
  %s2 = sld [smem:[#allocation0]]
  $region18: #{tpu_custom_call.1} parent=0
    _
  %s4 = ssub.s32 1, %s2
  %s5 = scalar_select 0, %s4, %s2
  $region1: #{tpu_custom_call.1} parent=0
    #allocation2 [shape = 'u8[8192]{0}', space=vmem, size = 0x2000, scoped, tag = 'input window, operand 0, single buffered']
    #allocation3 [shape = 's32[1]{0}', space=sflag, size = 0x4, scoped, tag = 'scoped memory for tpu_custom_call.1']
    #allocation4 [shape = 's32[1]{0}', space=sflag, size = 0x4, scoped, tag = 'scoped memory for tpu_custom_call.1']
    #allocation5 [shape = 'u8[8192]{0}', space=vmem, size = 0x2000, scoped, tag = 'output window, operand 0, single buffered']
    %6 = vsyncpa [#allocation3], 0
    %7 = vsyncpa [#allocation4], 0
    // Predicated region
    $region2: #{tpu_custom_call.1} parent=1 // pred_check
      _
    $region3: #{tpu_custom_call.1} parent=1 // pred_check_branch
      %9 = sbr.rel (0) target = $region5
    $region4: #{tpu_custom_call.1} parent=1 // pred_region
      %s11 = ssub.s32 256, 256
      %12 = vsyncadd [#allocation3], %s11
      %s14 = sshll.u32 [#allocation2], 4
      %s15 = int_to_ptr.vmem [resolvable:$true] %s14
      %17 = dma.hbm_to_vmem [thread:$0]  %s0, 256, %s15, [#allocation3]
    $region5: #{tpu_custom_call.1} parent=1 // pred_fallthru
      _
    // Predicated region
    $region6: #{tpu_custom_call.1} parent=1 // pred_check
      _
    $region7: #{tpu_custom_call.1} parent=1 // pred_check_branch
      %19 = sbr.rel (0) target = $region9
    $region8: #{tpu_custom_call.1} parent=1 // pred_region
      %20 = dma.done [#allocation3], 256
    $region9: #{tpu_custom_call.1} parent=1 // pred_fallthru
      _
    %v21 = vld [vmem:[#allocation2] sm:$0xff]
    %v22 = vld [vmem:[#allocation2 + $0x8] sm:$0xff]
    %v23 = vmin.f32 %v21, 20.0
    %v24 = vmin.f32 %v22, 20.0
    %v25 = vmul.f32 %v23, 1.442695
    %v26 = vpow.pop %v25
    %v27 = vmul.f32 %v24, 1.442695
    %v28 = vpow.pop %v27
    %v29 = vadd.f32 %v26, 2.0
    %v30 = vadd.f32 %v28, 2.0
    %v31 = vmul.f32 %v26, %v29
    %v32 = vmul.f32 %v28, %v30
    %v33 = vadd.f32 %v31, 2.0
    %v34 = vadd.f32 %v32, 2.0
    %v37 = vcombine.high %v33, %v33
    %v39 = vunpack.c.l.s4 1983009808
    %v40 = vunpack.c.0.s8 %v39
    %v41 = vlaneseq
    %v42 = vshrl.u32 %v41, 7
    %v43 = vsub.s32 %v40, %v42
    %v44 = vrot.slane %v33, %v43
    %v46 = vunpack.c.l.s4 1983009808
    %v47 = vunpack.c.0.s8 %v46
    %v48 = vlaneseq
    %v49 = vshrl.u32 %v48, 7
    %v50 = vsub.s32 %v47, %v49
    %v51 = vrot.slane %v37, %v50
    %v52 = vcombine.high %v44, %v44
    %v53 = vcombine.high %v51, %v51
    %v54 = vcombine.high %v34, %v34
    %v56 = vunpack.c.l.s4 1983009808
    %v57 = vunpack.c.0.s8 %v56
    %v58 = vlaneseq
    %v59 = vshrl.u32 %v58, 7
    %v60 = vsub.s32 %v57, %v59
    %v61 = vrot.slane %v34, %v60
    %v63 = vunpack.c.l.s4 1983009808
    %v64 = vunpack.c.0.s8 %v63
    %v65 = vlaneseq
    %v66 = vshrl.u32 %v65, 7
    %v67 = vsub.s32 %v64, %v66
    %v68 = vrot.slane %v54, %v67
    %v69 = vcombine.high %v61, %v61
    %v70 = vcombine.high %v68, %v68
    %v71 = vsub.s32 2129859011, %v44
    %v72 = vsub.s32 2129859011, %v52
    %v73 = vsub.s32 2129859011, %v51
    %v74 = vsub.s32 2129859011, %v53
    %v75 = vsub.s32 2129859011, %v61
    %v76 = vsub.s32 2129859011, %v69
    %v77 = vsub.s32 2129859011, %v68
    %v78 = vsub.s32 2129859011, %v70
    %v87 = vcombine.low %v71, %v72
    %v88 = vcombine.low %v73, %v74
    %v90 = vunpack.c.l.s4 1983009808
    %v91 = vunpack.c.0.s8 %v90
    %v92 = vlaneseq
    %v93 = vshrl.u32 %v92, 7
    %v94 = vsub.s32 %v91, %v93
    %v95 = vrot.slane %v87, %v94
    %v97 = vunpack.c.l.s4 1983009808
    %v98 = vunpack.c.0.s8 %v97
    %v99 = vlaneseq
    %v100 = vshrl.u32 %v99, 7
    %v101 = vsub.s32 %v98, %v100
    %v102 = vrot.slane %v88, %v101
    %v103 = vcombine.low %v95, %v102
    %v104 = vcombine.low %v75, %v76
    %v105 = vcombine.low %v77, %v78
    %v107 = vunpack.c.l.s4 1983009808
    %v108 = vunpack.c.0.s8 %v107
    %v109 = vlaneseq
    %v110 = vshrl.u32 %v109, 7
    %v111 = vsub.s32 %v108, %v110
    %v112 = vrot.slane %v104, %v111
    %v114 = vunpack.c.l.s4 1983009808
    %v115 = vunpack.c.0.s8 %v114
    %v116 = vlaneseq
    %v117 = vshrl.u32 %v116, 7
    %v118 = vsub.s32 %v115, %v117
    %v119 = vrot.slane %v105, %v118
    %v120 = vcombine.low %v112, %v119
    %v123 = vmul.f32 %v33, %v103
    %v124 = vmul.f32 %v34, %v120
    %v125 = vsub.f32 2.0, %v123
    %v126 = vsub.f32 2.0, %v124
    %v129 = vcombine.high %v125, %v125
    %v131 = vunpack.c.l.s4 1983009808
    %v132 = vunpack.c.0.s8 %v131
    %v133 = vlaneseq
    %v134 = vshrl.u32 %v133, 7
    %v135 = vsub.s32 %v132, %v134
    %v136 = vrot.slane %v125, %v135
    %v138 = vunpack.c.l.s4 1983009808
    %v139 = vunpack.c.0.s8 %v138
    %v140 = vlaneseq
    %v141 = vshrl.u32 %v140, 7
    %v142 = vsub.s32 %v139, %v141
    %v143 = vrot.slane %v129, %v142
    %v144 = vcombine.high %v136, %v136
    %v145 = vcombine.high %v143, %v143
    %v146 = vcombine.high %v126, %v126
    %v148 = vunpack.c.l.s4 1983009808
    %v149 = vunpack.c.0.s8 %v148
    %v150 = vlaneseq
    %v151 = vshrl.u32 %v150, 7
    %v152 = vsub.s32 %v149, %v151
    %v153 = vrot.slane %v126, %v152
    %v155 = vunpack.c.l.s4 1983009808
    %v156 = vunpack.c.0.s8 %v155
    %v157 = vlaneseq
    %v158 = vshrl.u32 %v157, 7
    %v159 = vsub.s32 %v156, %v158
    %v160 = vrot.slane %v146, %v159
    %v161 = vcombine.high %v153, %v153
    %v162 = vcombine.high %v160, %v160
    %v171 = vmul.f32 %v71, %v136
    %v172 = vmul.f32 %v72, %v144
    %v173 = vmul.f32 %v73, %v143
    %v174 = vmul.f32 %v74, %v145
    %v175 = vmul.f32 %v75, %v153
    %v176 = vmul.f32 %v76, %v161
    %v177 = vmul.f32 %v77, %v160
    %v178 = vmul.f32 %v78, %v162
    %v187 = vcombine.low %v171, %v172
    %v188 = vcombine.low %v173, %v174
    %v190 = vunpack.c.l.s4 1983009808
    %v191 = vunpack.c.0.s8 %v190
    %v192 = vlaneseq
    %v193 = vshrl.u32 %v192, 7
    %v194 = vsub.s32 %v191, %v193
    %v195 = vrot.slane %v187, %v194
    %v197 = vunpack.c.l.s4 1983009808
    %v198 = vunpack.c.0.s8 %v197
    %v199 = vlaneseq
    %v200 = vshrl.u32 %v199, 7
    %v201 = vsub.s32 %v198, %v200
    %v202 = vrot.slane %v188, %v201
    %v203 = vcombine.low %v195, %v202
    %v204 = vcombine.low %v175, %v176
    %v205 = vcombine.low %v177, %v178
    %v207 = vunpack.c.l.s4 1983009808
    %v208 = vunpack.c.0.s8 %v207
    %v209 = vlaneseq
    %v210 = vshrl.u32 %v209, 7
    %v211 = vsub.s32 %v208, %v210
    %v212 = vrot.slane %v204, %v211
    %v214 = vunpack.c.l.s4 1983009808
    %v215 = vunpack.c.0.s8 %v214
    %v216 = vlaneseq
    %v217 = vshrl.u32 %v216, 7
    %v218 = vsub.s32 %v215, %v217
    %v219 = vrot.slane %v205, %v218
    %v220 = vcombine.low %v212, %v219
    %v223 = vmul.f32 %v33, %v203
    %v224 = vmul.f32 %v34, %v220
    %v225 = vsub.f32 2.0, %v223
    %v226 = vsub.f32 2.0, %v224
    %v229 = vcombine.high %v225, %v225
    %v231 = vunpack.c.l.s4 1983009808
    %v232 = vunpack.c.0.s8 %v231
    %v233 = vlaneseq
    %v234 = vshrl.u32 %v233, 7
    %v235 = vsub.s32 %v232, %v234
    %v236 = vrot.slane %v225, %v235
    %v238 = vunpack.c.l.s4 1983009808
    %v239 = vunpack.c.0.s8 %v238
    %v240 = vlaneseq
    %v241 = vshrl.u32 %v240, 7
    %v242 = vsub.s32 %v239, %v241
    %v243 = vrot.slane %v229, %v242
    %v244 = vcombine.high %v236, %v236
    %v245 = vcombine.high %v243, %v243
    %v246 = vcombine.high %v226, %v226
    %v248 = vunpack.c.l.s4 1983009808
    %v249 = vunpack.c.0.s8 %v248
    %v250 = vlaneseq
    %v251 = vshrl.u32 %v250, 7
    %v252 = vsub.s32 %v249, %v251
    %v253 = vrot.slane %v226, %v252
    %v255 = vunpack.c.l.s4 1983009808
    %v256 = vunpack.c.0.s8 %v255
    %v257 = vlaneseq
    %v258 = vshrl.u32 %v257, 7
    %v259 = vsub.s32 %v256, %v258
    %v260 = vrot.slane %v246, %v259
    %v261 = vcombine.high %v253, %v253
    %v262 = vcombine.high %v260, %v260
    %v271 = vmul.f32 %v171, %v236
    %v272 = vmul.f32 %v172, %v244
    %v273 = vmul.f32 %v173, %v243
    %v274 = vmul.f32 %v174, %v245
    %v275 = vmul.f32 %v175, %v253
    %v276 = vmul.f32 %v176, %v261
    %v277 = vmul.f32 %v177, %v260
    %v278 = vmul.f32 %v178, %v262
    %v287 = vcombine.low %v271, %v272
    %v288 = vcombine.low %v273, %v274
    %v290 = vunpack.c.l.s4 1983009808
    %v291 = vunpack.c.0.s8 %v290
    %v292 = vlaneseq
    %v293 = vshrl.u32 %v292, 7
    %v294 = vsub.s32 %v291, %v293
    %v295 = vrot.slane %v287, %v294
    %v297 = vunpack.c.l.s4 1983009808
    %v298 = vunpack.c.0.s8 %v297
    %v299 = vlaneseq
    %v300 = vshrl.u32 %v299, 7
    %v301 = vsub.s32 %v298, %v300
    %v302 = vrot.slane %v288, %v301
    %v303 = vcombine.low %v295, %v302
    %v304 = vcombine.low %v275, %v276
    %v305 = vcombine.low %v277, %v278
    %v307 = vunpack.c.l.s4 1983009808
    %v308 = vunpack.c.0.s8 %v307
    %v309 = vlaneseq
    %v310 = vshrl.u32 %v309, 7
    %v311 = vsub.s32 %v308, %v310
    %v312 = vrot.slane %v304, %v311
    %v314 = vunpack.c.l.s4 1983009808
    %v315 = vunpack.c.0.s8 %v314
    %v316 = vlaneseq
    %v317 = vshrl.u32 %v316, 7
    %v318 = vsub.s32 %v315, %v317
    %v319 = vrot.slane %v305, %v318
    %v320 = vcombine.low %v312, %v319
    %v323 = vmul.f32 %v33, %v303
    %v324 = vmul.f32 %v34, %v320
    %v325 = vsub.f32 2.0, %v323
    %v326 = vsub.f32 2.0, %v324
    %v329 = vcombine.high %v325, %v325
    %v331 = vunpack.c.l.s4 1983009808
    %v332 = vunpack.c.0.s8 %v331
    %v333 = vlaneseq
    %v334 = vshrl.u32 %v333, 7
    %v335 = vsub.s32 %v332, %v334
    %v336 = vrot.slane %v325, %v335
    %v338 = vunpack.c.l.s4 1983009808
    %v339 = vunpack.c.0.s8 %v338
    %v340 = vlaneseq
    %v341 = vshrl.u32 %v340, 7
    %v342 = vsub.s32 %v339, %v341
    %v343 = vrot.slane %v329, %v342
    %v344 = vcombine.high %v336, %v336
    %v345 = vcombine.high %v343, %v343
    %v346 = vcombine.high %v326, %v326
    %v348 = vunpack.c.l.s4 1983009808
    %v349 = vunpack.c.0.s8 %v348
    %v350 = vlaneseq
    %v351 = vshrl.u32 %v350, 7
    %v352 = vsub.s32 %v349, %v351
    %v353 = vrot.slane %v326, %v352
    %v355 = vunpack.c.l.s4 1983009808
    %v356 = vunpack.c.0.s8 %v355
    %v357 = vlaneseq
    %v358 = vshrl.u32 %v357, 7
    %v359 = vsub.s32 %v356, %v358
    %v360 = vrot.slane %v346, %v359
    %v361 = vcombine.high %v353, %v353
    %v362 = vcombine.high %v360, %v360
    %v371 = vmul.f32 %v271, %v336
    %v372 = vmul.f32 %v272, %v344
    %v373 = vmul.f32 %v273, %v343
    %v374 = vmul.f32 %v274, %v345
    %v375 = vmul.f32 %v275, %v353
    %v376 = vmul.f32 %v276, %v361
    %v377 = vmul.f32 %v277, %v360
    %v378 = vmul.f32 %v278, %v362
    %vm379 = vcmp.gt.f32.partialorder %v21, 20.0
    %vm380 = vcmp.gt.f32.partialorder %v22, 20.0
    %v381 = vmul.f32 %v21, %v31
    %v382 = vmul.f32 %v22, %v32
    %v391 = vcombine.low %v371, %v372
    %v392 = vcombine.low %v373, %v374
    %v394 = vunpack.c.l.s4 1983009808
    %v395 = vunpack.c.0.s8 %v394
    %v396 = vlaneseq
    %v397 = vshrl.u32 %v396, 7
    %v398 = vsub.s32 %v395, %v397
    %v399 = vrot.slane %v391, %v398
    %v401 = vunpack.c.l.s4 1983009808
    %v402 = vunpack.c.0.s8 %v401
    %v403 = vlaneseq
    %v404 = vshrl.u32 %v403, 7
    %v405 = vsub.s32 %v402, %v404
    %v406 = vrot.slane %v392, %v405
    %v407 = vcombine.low %v399, %v406
    %v408 = vcombine.low %v375, %v376
    %v409 = vcombine.low %v377, %v378
    %v411 = vunpack.c.l.s4 1983009808
    %v412 = vunpack.c.0.s8 %v411
    %v413 = vlaneseq
    %v414 = vshrl.u32 %v413, 7
    %v415 = vsub.s32 %v412, %v414
    %v416 = vrot.slane %v408, %v415
    %v418 = vunpack.c.l.s4 1983009808
    %v419 = vunpack.c.0.s8 %v418
    %v420 = vlaneseq
    %v421 = vshrl.u32 %v420, 7
    %v422 = vsub.s32 %v419, %v421
    %v423 = vrot.slane %v409, %v422
    %v424 = vcombine.low %v416, %v423
    %v427 = vmul.f32 %v381, %v407
    %v428 = vmul.f32 %v382, %v424
    %v429 = vsel %vm379, %v21, %v427
    %v430 = vsel %vm380, %v22, %v428
    %431 = vst [vmem:[#allocation5] sm:$0xff] %v429
    %432 = vst [vmem:[#allocation5 + $0x8] sm:$0xff] %v430
    // Predicated region
    $region10: #{tpu_custom_call.1} parent=1 // pred_check
      _
    $region11: #{tpu_custom_call.1} parent=1 // pred_check_branch
      %434 = sbr.rel (0) target = $region13
    $region12: #{tpu_custom_call.1} parent=1 // pred_region
      %s436 = ssub.s32 256, 256
      %437 = vsyncadd [#allocation4], %s436
      %s439 = sshll.u32 [#allocation5], 4
      %s440 = int_to_ptr.vmem [resolvable:$true] %s439
      %442 = dma.vmem_to_hbm [thread:$0]  %s440, 256, %s1, [#allocation4]
    $region13: #{tpu_custom_call.1} parent=1 // pred_fallthru
      _
    // Predicated region
    $region14: #{tpu_custom_call.1} parent=1 // pred_check
      _
    $region15: #{tpu_custom_call.1} parent=1 // pred_check_branch
      %444 = sbr.rel (0) target = $region17
    $region16: #{tpu_custom_call.1} parent=1 // pred_region
      %445 = dma.done [#allocation4], 256
    $region17: #{tpu_custom_call.1} parent=1 // pred_fallthru
      _
    %446 = vsyncpa [#allocation3], 1
    %447 = vsyncpa [#allocation4], 1

</llo_original>
